<compile_context>
chip_gen: v7x
topology: tpu7x:2x2x1
jax: 0.10.0
libtpu: 0.0.40
codegen_flags: <defaults>
</compile_context>

<pallas_src>
import functools

import jax
import jax.numpy as jnp
from jax import lax
from jax.experimental import pallas as pl
from jax.experimental.pallas import tpu as pltpu

N_FEATURES = 61
H1, H2, H3, OUT = 128, 50, 24, 1
LANE = 128
MAX_TM = 2048  # lane-tile width; ~3-4 MB working set per tile in f32/bf16


def mlp_kernel(x_ref, w1_ref, b1_ref, w2_ref, b2_ref,
               w3_ref, b3_ref, w4_ref, b4_ref, o_ref):
    # x_ref: (TM, 61) tile straight from HBM.  Contract on the feature axis so
    # the batch lands on the lane axis (no materialized transpose).
    xb = x_ref[...].astype(jnp.bfloat16)                                  # (TM, 61)
    h = lax.dot_general(w1_ref[...], xb, (((1,), (1,)), ((), ())),
                        preferred_element_type=jnp.float32)               # (128, TM)
    h = jnp.maximum(h + b1_ref[...], 0.0)
    h = jnp.dot(w2_ref[...], h.astype(jnp.bfloat16),
                preferred_element_type=jnp.float32)                        # (50, TM)
    h = jnp.maximum(h + b2_ref[...], 0.0)
    h = jnp.dot(w3_ref[...], h.astype(jnp.bfloat16),
                preferred_element_type=jnp.float32)                        # (24, TM)
    h = jnp.maximum(h + b3_ref[...], 0.0)
    z = jnp.dot(w4_ref[...], h.astype(jnp.bfloat16),
                preferred_element_type=jnp.float32) + b4_ref[...]          # (1, TM)
    o_ref[...] = jax.nn.sigmoid(z)                                         # lane-dense store


def _round_up(a, m):
    return ((a + m - 1) // m) * m


@functools.lru_cache(maxsize=1)
def _num_tensorcores():
    """Heuristic TC-per-chip count; safe fallback is 1 (perf-only decision)."""
    try:
        kind = jax.devices()[0].device_kind.lower()
    except Exception:
        return 1
    return 2 if any(t in kind for t in ("v7", "v4", "v5p")) else 1


def _choose_tile(batch, max_tm=MAX_TM, num_tc=None):
    """Pick the lane-aligned batch tile and grid length.

    Single-TC (v5e/v6e): fewest steps (least per-step overhead).
    Two-TC (v7x): even, balanced step count so neither core idles.
    """
    if num_tc is None:
        num_tc = _num_tensorcores()
    b128 = _round_up(batch, LANE)
    if num_tc > 1 and b128 > LANE:
        steps = num_tc * pl.cdiv(b128, num_tc * max_tm)
    else:
        steps = pl.cdiv(b128, max_tm)
    tm = min(_round_up(pl.cdiv(b128, steps), LANE), max_tm)
    grid_m = pl.cdiv(batch, tm)
    return tm, grid_m


@functools.partial(jax.jit, static_argnames=("max_tm", "num_tc"))
def mlp_forward(x, params, *, max_tm=MAX_TM, num_tc=None):
    (w1, b1), (w2, b2), (w3, b3), (w4, b4) = params
    B = x.shape[0]
    tm, grid_m = _choose_tile(B, max_tm=max_tm, num_tc=num_tc)

    rep = lambda i: (0, 0)  # weights / biases stay resident across the grid

    out_t = pl.pallas_call(
        mlp_kernel,
        out_shape=jax.ShapeDtypeStruct((OUT, B), jnp.float32),
        grid_spec=pltpu.PrefetchScalarGridSpec(
            num_scalar_prefetch=0,
            grid=(grid_m,),
            in_specs=[
                pl.BlockSpec((tm, N_FEATURES), lambda i: (i, 0)),  # x tile (B,61) as-is
                pl.BlockSpec((H1, N_FEATURES), rep),               # w1 (out, in) bf16
                pl.BlockSpec((H1, 1), rep),                        # b1 (out, 1)  f32
                pl.BlockSpec((H2, H1), rep),                       # w2
                pl.BlockSpec((H2, 1), rep),                        # b2
                pl.BlockSpec((H3, H2), rep),                       # w3
                pl.BlockSpec((H3, 1), rep),                        # b3
                pl.BlockSpec((OUT, H3), rep),                      # w4
                pl.BlockSpec((OUT, 1), rep),                       # b4
            ],
            out_specs=pl.BlockSpec((OUT, tm), lambda i: (0, i)),
        ),
        compiler_params=pltpu.CompilerParams(
            dimension_semantics=("parallel",),
        ),
    )(x,
      w1.astype(jnp.bfloat16), b1,
      w2.astype(jnp.bfloat16), b2,
      w3.astype(jnp.bfloat16), b3,
      w4.astype(jnp.bfloat16), b4)

    return out_t.reshape(B, OUT)                                   # (B, 1)


def init_linear(key, fan_in, fan_out):
    """torch.nn.Linear default init: U(-1/sqrt(fan_in), 1/sqrt(fan_in)).

    Weight in torch layout (fan_out, fan_in); bias stored as a (fan_out, 1)
    column so W @ xT + b broadcasts over the lane (batch) axis in the kernel.
    """
    kw, kb = jax.random.split(key)
    bound = 1.0 / jnp.sqrt(fan_in)
    w = jax.random.uniform(kw, (fan_out, fan_in), jnp.float32, -bound, bound)
    b = jax.random.uniform(kb, (fan_out, 1), jnp.float32, -bound, bound)
    return w, b


def reference_forward(x, params):
    (w1, b1), (w2, b2), (w3, b3), (w4, b4) = params
    h = jax.nn.relu(x @ w1.T + b1.T)
    h = jax.nn.relu(h @ w2.T + b2.T)
    h = jax.nn.relu(h @ w3.T + b3.T)
    return jax.nn.sigmoid(h @ w4.T + b4.T)


if __name__ == "__main__":
    key = jax.random.PRNGKey(0)
    k1, k2, k3, k4, kx1, kx2 = jax.random.split(key, 6)

    params = (
        init_linear(k1, N_FEATURES, H1),
        init_linear(k2, H1, H2),
        init_linear(k3, H2, H3),
        init_linear(k4, H3, OUT),
    )

    # bf16 matmul inputs with f32 accumulation -> tolerance ~1e-2.
    TOL = dict(atol=2e-2, rtol=2e-2)

    # Small batch: single partial block (masked load + masked lane-store path).
    x_small = jax.random.normal(kx1, (16, N_FEATURES), dtype=jnp.float32)
    out_small = jax.block_until_ready(mlp_forward(x_small, params))
    ref_small = reference_forward(x_small, params)
    assert out_small.shape == (16, OUT)
    assert jnp.allclose(out_small, ref_small, **TOL), "mismatch (small)"

    # Larger ragged batch: exercises the tile-selection heuristic.
    x_big = jax.random.normal(kx2, (600, N_FEATURES), dtype=jnp.float32)
    out_big = jax.block_until_ready(mlp_forward(x_big, params))
    ref_big = reference_forward(x_big, params)
    assert out_big.shape == (600, OUT)
    assert jnp.allclose(out_big, ref_big, **TOL), "mismatch (big)"

    # Forced small tile: multi-step grid with a masked partial last block.
    out_multi = jax.block_until_ready(mlp_forward(x_big, params, max_tm=256))
    assert out_multi.shape == (600, OUT)
    assert jnp.allclose(out_multi, ref_big, **TOL), "mismatch (multi-block)"

    # TODO(synk): fit() (BCELoss/Adam training loop), ROC scoring, plotting and
    # file I/O from the PyTorch module are host-side utilities, not part of the
    # forward pass, and are not translated to Pallas.
    print("KERNEL_OK")
</pallas_src>

<mosaic_0001>
module attributes {stable_mosaic.version = 11 : i64} {
  func.func @mlp_kernel(%arg0: i32, %arg1: memref<128x61xf32, #tpu.memory_space<vmem>>, %arg2: memref<128x61xbf16, #tpu.memory_space<vmem>>, %arg3: memref<128x1xf32, #tpu.memory_space<vmem>>, %arg4: memref<50x128xbf16, #tpu.memory_space<vmem>>, %arg5: memref<50x1xf32, #tpu.memory_space<vmem>>, %arg6: memref<24x50xbf16, #tpu.memory_space<vmem>>, %arg7: memref<24x1xf32, #tpu.memory_space<vmem>>, %arg8: memref<1x24xbf16, #tpu.memory_space<vmem>>, %arg9: memref<1x1xf32, #tpu.memory_space<vmem>>, %arg10: memref<1x128xf32, #tpu.memory_space<vmem>>) attributes {dimension_semantics = [#tpu.dimension_semantics<parallel>], iteration_bounds = array<i64: 1>, scalar_prefetch = 0 : i64, scratch_operands = 0 : i64, tpu.core_type = #tpu.core_type<tc>, window_params = [{transform_indices = @transform_0, window_bounds = array<i64: 128, 61>}, {pipeline_mode = #tpu.pipeline_mode<synchronous>, transform_indices = @transform_1, window_bounds = array<i64: 128, 61>}, {pipeline_mode = #tpu.pipeline_mode<synchronous>, transform_indices = @transform_2, window_bounds = array<i64: 128, 1>}, {pipeline_mode = #tpu.pipeline_mode<synchronous>, transform_indices = @transform_3, window_bounds = array<i64: 50, 128>}, {pipeline_mode = #tpu.pipeline_mode<synchronous>, transform_indices = @transform_4, window_bounds = array<i64: 50, 1>}, {pipeline_mode = #tpu.pipeline_mode<synchronous>, transform_indices = @transform_5, window_bounds = array<i64: 24, 50>}, {pipeline_mode = #tpu.pipeline_mode<synchronous>, transform_indices = @transform_6, window_bounds = array<i64: 24, 1>}, {pipeline_mode = #tpu.pipeline_mode<synchronous>, transform_indices = @transform_7, window_bounds = array<i64: 1, 24>}, {pipeline_mode = #tpu.pipeline_mode<synchronous>, transform_indices = @transform_8, window_bounds = array<i64: 1, 1>}, {transform_indices = @transform_9, window_bounds = array<i64: 1, 128>}]} {
    %c0 = arith.constant 0 : index
    %c0_0 = arith.constant 0 : index
    %0 = vector.load %arg1[%c0, %c0_0] : memref<128x61xf32, #tpu.memory_space<vmem>>, vector<128x61xf32>
    %1 = arith.truncf %0 : vector<128x61xf32> to vector<128x61xbf16>
    %c0_1 = arith.constant 0 : index
    %c0_2 = arith.constant 0 : index
    %2 = vector.load %arg2[%c0_1, %c0_2] : memref<128x61xbf16, #tpu.memory_space<vmem>>, vector<128x61xbf16>
    %cst = arith.constant dense<0.000000e+00> : vector<128x128xf32>
    %3 = tpu.matmul %2, %1, %cst {dimension_numbers = #tpu.dot_dimension_numbers<[1], [1], [0], [0], [0, 0, 1, 0], [], []>} : vector<128x61xbf16>, vector<128x61xbf16>, vector<128x128xf32> -> vector<128x128xf32>
    %c0_3 = arith.constant 0 : index
    %c0_4 = arith.constant 0 : index
    %4 = vector.load %arg3[%c0_3, %c0_4] : memref<128x1xf32, #tpu.memory_space<vmem>>, vector<128x1xf32>
    %5 = vector.broadcast %4 : vector<128x1xf32> to vector<128x128xf32>
    %6 = arith.addf %3, %5 : vector<128x128xf32>
    %cst_5 = arith.constant 0.000000e+00 : f32
    %7 = vector.broadcast %cst_5 : f32 to vector<128x128xf32>
    %8 = arith.maximumf %6, %7 : vector<128x128xf32>
    %c0_6 = arith.constant 0 : index
    %c0_7 = arith.constant 0 : index
    %9 = vector.load %arg4[%c0_6, %c0_7] : memref<50x128xbf16, #tpu.memory_space<vmem>>, vector<50x128xbf16>
    %10 = arith.truncf %8 : vector<128x128xf32> to vector<128x128xbf16>
    %cst_8 = arith.constant dense<0.000000e+00> : vector<50x128xf32>
    %11 = tpu.matmul %9, %10, %cst_8 {dimension_numbers = #tpu.dot_dimension_numbers<[1], [0], [0], [1], [0, 0, 1, 1], [], []>} : vector<50x128xbf16>, vector<128x128xbf16>, vector<50x128xf32> -> vector<50x128xf32>
    %c0_9 = arith.constant 0 : index
    %c0_10 = arith.constant 0 : index
    %12 = vector.load %arg5[%c0_9, %c0_10] : memref<50x1xf32, #tpu.memory_space<vmem>>, vector<50x1xf32>
    %13 = vector.broadcast %12 : vector<50x1xf32> to vector<50x128xf32>
    %14 = arith.addf %11, %13 : vector<50x128xf32>
    %cst_11 = arith.constant 0.000000e+00 : f32
    %15 = vector.broadcast %cst_11 : f32 to vector<50x128xf32>
    %16 = arith.maximumf %14, %15 : vector<50x128xf32>
    %c0_12 = arith.constant 0 : index
    %c0_13 = arith.constant 0 : index
    %17 = vector.load %arg6[%c0_12, %c0_13] : memref<24x50xbf16, #tpu.memory_space<vmem>>, vector<24x50xbf16>
    %18 = arith.truncf %16 : vector<50x128xf32> to vector<50x128xbf16>
    %cst_14 = arith.constant dense<0.000000e+00> : vector<24x128xf32>
    %19 = tpu.matmul %17, %18, %cst_14 {dimension_numbers = #tpu.dot_dimension_numbers<[1], [0], [0], [1], [0, 0, 1, 1], [], []>} : vector<24x50xbf16>, vector<50x128xbf16>, vector<24x128xf32> -> vector<24x128xf32>
    %c0_15 = arith.constant 0 : index
    %c0_16 = arith.constant 0 : index
    %20 = vector.load %arg7[%c0_15, %c0_16] : memref<24x1xf32, #tpu.memory_space<vmem>>, vector<24x1xf32>
    %21 = vector.broadcast %20 : vector<24x1xf32> to vector<24x128xf32>
    %22 = arith.addf %19, %21 : vector<24x128xf32>
    %cst_17 = arith.constant 0.000000e+00 : f32
    %23 = vector.broadcast %cst_17 : f32 to vector<24x128xf32>
    %24 = arith.maximumf %22, %23 : vector<24x128xf32>
    %c0_18 = arith.constant 0 : index
    %c0_19 = arith.constant 0 : index
    %25 = vector.load %arg8[%c0_18, %c0_19] : memref<1x24xbf16, #tpu.memory_space<vmem>>, vector<1x24xbf16>
    %26 = arith.truncf %24 : vector<24x128xf32> to vector<24x128xbf16>
    %cst_20 = arith.constant dense<0.000000e+00> : vector<1x128xf32>
    %27 = tpu.matmul %25, %26, %cst_20 {dimension_numbers = #tpu.dot_dimension_numbers<[1], [0], [0], [1], [0, 0, 1, 1], [], []>} : vector<1x24xbf16>, vector<24x128xbf16>, vector<1x128xf32> -> vector<1x128xf32>
    %c0_21 = arith.constant 0 : index
    %c0_22 = arith.constant 0 : index
    %28 = vector.load %arg9[%c0_21, %c0_22] : memref<1x1xf32, #tpu.memory_space<vmem>>, vector<1x1xf32>
    %29 = vector.broadcast %28 : vector<1x1xf32> to vector<1x128xf32>
    %30 = arith.addf %27, %29 : vector<1x128xf32>
    %31 = arith.negf %30 : vector<1x128xf32>
    %32 = math.exp %31 : vector<1x128xf32>
    %cst_23 = arith.constant 1.000000e+00 : f32
    %33 = vector.broadcast %cst_23 : f32 to vector<1x128xf32>
    %34 = arith.addf %33, %32 : vector<1x128xf32>
    %35 = arith.divf %33, %34 : vector<1x128xf32>
    %c0_24 = arith.constant 0 : index
    %c0_25 = arith.constant 0 : index
    %36 = vector.load %arg10[%c0_24, %c0_25] : memref<1x128xf32, #tpu.memory_space<vmem>>, vector<1x128xf32>
    tpu.vector_store %arg10[%c0_24, %c0_25], %35 {strides = array<i32>} : memref<1x128xf32, #tpu.memory_space<vmem>>, vector<1x128xf32>,
    return
  }
  func.func @transform_0(%arg0: i32) -> (i32, i32) {
    %c0_i32 = arith.constant 0 : i32
    %c0_i32_0 = arith.constant 0 : i32
    return %arg0, %c0_i32 : i32, i32
  }
  func.func @transform_1(%arg0: i32) -> (i32, i32) {
    %c0_i32 = arith.constant 0 : i32
    %c0_i32_0 = arith.constant 0 : i32
    %c0_i32_1 = arith.constant 0 : i32
    return %c0_i32, %c0_i32_0 : i32, i32
  }
  func.func @transform_2(%arg0: i32) -> (i32, i32) {
    %c0_i32 = arith.constant 0 : i32
    %c0_i32_0 = arith.constant 0 : i32
    %c0_i32_1 = arith.constant 0 : i32
    return %c0_i32, %c0_i32_0 : i32, i32
  }
  func.func @transform_3(%arg0: i32) -> (i32, i32) {
    %c0_i32 = arith.constant 0 : i32
    %c0_i32_0 = arith.constant 0 : i32
    %c0_i32_1 = arith.constant 0 : i32
    return %c0_i32, %c0_i32_0 : i32, i32
  }
  func.func @transform_4(%arg0: i32) -> (i32, i32) {
    %c0_i32 = arith.constant 0 : i32
    %c0_i32_0 = arith.constant 0 : i32
    %c0_i32_1 = arith.constant 0 : i32
    return %c0_i32, %c0_i32_0 : i32, i32
  }
  func.func @transform_5(%arg0: i32) -> (i32, i32) {
    %c0_i32 = arith.constant 0 : i32
    %c0_i32_0 = arith.constant 0 : i32
    %c0_i32_1 = arith.constant 0 : i32
    return %c0_i32, %c0_i32_0 : i32, i32
  }
  func.func @transform_6(%arg0: i32) -> (i32, i32) {
    %c0_i32 = arith.constant 0 : i32
    %c0_i32_0 = arith.constant 0 : i32
    %c0_i32_1 = arith.constant 0 : i32
    return %c0_i32, %c0_i32_0 : i32, i32
  }
  func.func @transform_7(%arg0: i32) -> (i32, i32) {
    %c0_i32 = arith.constant 0 : i32
    %c0_i32_0 = arith.constant 0 : i32
    %c0_i32_1 = arith.constant 0 : i32
    return %c0_i32, %c0_i32_0 : i32, i32
  }
  func.func @transform_8(%arg0: i32) -> (i32, i32) {
    %c0_i32 = arith.constant 0 : i32
    %c0_i32_0 = arith.constant 0 : i32
    %c0_i32_1 = arith.constant 0 : i32
    return %c0_i32, %c0_i32_0 : i32, i32
  }
  func.func @transform_9(%arg0: i32) -> (i32, i32) {
    %c0_i32 = arith.constant 0 : i32
    %c0_i32_0 = arith.constant 0 : i32
    return %c0_i32, %arg0 : i32, i32
  }
}

</mosaic_0001>

<llo_original>
// kernel: mlp_forward.1
$region0: #{mlp_forward.1}
  #allocation0 [shape = 'u32[]', space=smem, size = 0x4, offset = 0x4, fixed_abs, tag = 'smem constant byte address 0x4 - core index']
  #allocation1 [shape = 'u32[144,128]{1,0:T(1,128)}', space=vmem, size = 0x12000, scoped, tag = 'internal scratch']
  #allocation2 [shape = 'f32[1,1]{1,0:T(1,128)S(1)}', space=vmem, size = 0x200, scoped, tag = 'scoped memory for mlp_forward.1']
  %s0 = inlined_call_operand.vmem [shape: f32[16,61], index: 0, kind: input, shape index: {}]
  %s1 = inlined_call_operand.vmem [shape: bf16[128,61], index: 1, kind: input, shape index: {}]
  %s2 = inlined_call_operand.vmem [shape: f32[128,1], index: 2, kind: input, shape index: {}]
  %s3 = inlined_call_operand.vmem [shape: bf16[50,128], index: 3, kind: input, shape index: {}]
  %s4 = inlined_call_operand.vmem [shape: f32[50,1], index: 4, kind: input, shape index: {}]
  %s5 = inlined_call_operand.vmem [shape: bf16[24,50], index: 5, kind: input, shape index: {}]
  %s6 = inlined_call_operand.vmem [shape: f32[24,1], index: 6, kind: input, shape index: {}]
  %s7 = inlined_call_operand.vmem [shape: bf16[1,24], index: 7, kind: input, shape index: {}]
  %s8 = inlined_call_operand.<no memory space> [shape: f32[1,1], index: 8, kind: input, shape index: {}]
  %s9 = inlined_call_operand.hbm [shape: f32[1,16], index: 9, kind: output, shape index: {}]
  %s10 = sld [smem:[#allocation0]]
  $region46: #{mlp_forward.1} parent=0
    _
  %s12 = ssub.s32 1, %s10
  %s13 = scalar_select 0, %s12, %s10
  %v14 = vstv %s8
  %15 = vst [vmem:[#allocation2] sm:$0x1] %v14
  $region1: #{mlp_forward.1} parent=0
    #allocation3 [shape = 'u8[512]{0}', space=vmem, size = 0x400, scoped, tag = 'output window, operand 0, single buffered']
    #allocation4 [shape = 's32[1]{0}', space=sflag, size = 0x4, scoped, tag = 'scoped memory for mlp_forward.1']
    %16 = vsyncpa [#allocation4], 0
    // Predicated region
    $region2: #{mlp_forward.1} parent=1 // pred_check
      _
    $region3: #{mlp_forward.1} parent=1 // pred_check_branch
      %18 = sbr.rel (0) target = $region5
    $region4: #{mlp_forward.1} parent=1 // pred_region
      _
    $region5: #{mlp_forward.1} parent=1 // pred_fallthru
      _
    // Predicated region
    $region6: #{mlp_forward.1} parent=1 // pred_check
      _
    $region7: #{mlp_forward.1} parent=1 // pred_check_branch
      %20 = sbr.rel (0) target = $region9
    $region8: #{mlp_forward.1} parent=1 // pred_region
      _
    $region9: #{mlp_forward.1} parent=1 // pred_fallthru
      _
    // Predicated region
    $region10: #{mlp_forward.1} parent=1 // pred_check
      _
    $region11: #{mlp_forward.1} parent=1 // pred_check_branch
      %22 = sbr.rel (0) target = $region13
    $region12: #{mlp_forward.1} parent=1 // pred_region
      _
    $region13: #{mlp_forward.1} parent=1 // pred_fallthru
      _
    // Predicated region
    $region14: #{mlp_forward.1} parent=1 // pred_check
      _
    $region15: #{mlp_forward.1} parent=1 // pred_check_branch
      %24 = sbr.rel (0) target = $region17
    $region16: #{mlp_forward.1} parent=1 // pred_region
      _
    $region17: #{mlp_forward.1} parent=1 // pred_fallthru
      _
    // Predicated region
    $region18: #{mlp_forward.1} parent=1 // pred_check
      _
    $region19: #{mlp_forward.1} parent=1 // pred_check_branch
      %26 = sbr.rel (0) target = $region21
    $region20: #{mlp_forward.1} parent=1 // pred_region
      _
    $region21: #{mlp_forward.1} parent=1 // pred_fallthru
      _
    // Predicated region
    $region22: #{mlp_forward.1} parent=1 // pred_check
      _
    $region23: #{mlp_forward.1} parent=1 // pred_check_branch
      %28 = sbr.rel (0) target = $region25
    $region24: #{mlp_forward.1} parent=1 // pred_region
      _
    $region25: #{mlp_forward.1} parent=1 // pred_fallthru
      _
    // Predicated region
    $region26: #{mlp_forward.1} parent=1 // pred_check
      _
    $region27: #{mlp_forward.1} parent=1 // pred_check_branch
      %30 = sbr.rel (0) target = $region29
    $region28: #{mlp_forward.1} parent=1 // pred_region
      _
    $region29: #{mlp_forward.1} parent=1 // pred_fallthru
      _
    // Predicated region
    $region30: #{mlp_forward.1} parent=1 // pred_check
      _
    $region31: #{mlp_forward.1} parent=1 // pred_check_branch
      %32 = sbr.rel (0) target = $region33
    $region32: #{mlp_forward.1} parent=1 // pred_region
      _
    $region33: #{mlp_forward.1} parent=1 // pred_fallthru
      _
    // Predicated region
    $region34: #{mlp_forward.1} parent=1 // pred_check
      _
    $region35: #{mlp_forward.1} parent=1 // pred_check_branch
      %34 = sbr.rel (0) target = $region37
    $region36: #{mlp_forward.1} parent=1 // pred_region
      _
    $region37: #{mlp_forward.1} parent=1 // pred_fallthru
      _
    %v36 = vld [vmem:[%s0] sm:$0xff]
    %v37 = vld [vmem:[%s0 + $0x8] sm:$0xff]
    %v38 = vld [vmem:[%s0 + $0x10] sm:$0xff]
    %v39 = vld [vmem:[%s0 + $0x18] sm:$0xff]
    %v40 = vld [vmem:[%s0 + $0x20] sm:$0xff]
    %v41 = vld [vmem:[%s0 + $0x28] sm:$0xff]
    %v42 = vld [vmem:[%s0 + $0x30] sm:$0xff]
    %v43 = vld [vmem:[%s0 + $0x38] sm:$0xff]
    %v44 = vld [vmem:[%s0 + $0x40] sm:$0xff]
    %v45 = vld [vmem:[%s0 + $0x48] sm:$0xff]
    %v46 = vld [vmem:[%s0 + $0x50] sm:$0xff]
    %v47 = vld [vmem:[%s0 + $0x58] sm:$0xff]
    %v48 = vld [vmem:[%s0 + $0x60] sm:$0xff]
    %v49 = vld [vmem:[%s0 + $0x68] sm:$0xff]
    %v50 = vld [vmem:[%s0 + $0x70] sm:$0xff]
    %v51 = vld [vmem:[%s0 + $0x78] sm:$0xff]
    %v52 = vpack.c.bf16 %v37, %v36
    %v53 = vpack.c.bf16 %v39, %v38
    %v54 = vpack.c.bf16 %v41, %v40
    %v55 = vpack.c.bf16 %v43, %v42
    %v56 = vpack.c.bf16 %v45, %v44
    %v57 = vpack.c.bf16 %v47, %v46
    %v58 = vpack.c.bf16 %v49, %v48
    %v59 = vpack.c.bf16 %v51, %v50
    %v60 = vld [vmem:[%s1] sm:$0xf]
    %v61 = vld [vmem:[%s1 + $0x4] sm:$0xf]
    %v62 = vld [vmem:[%s1 + $0x8] sm:$0xf]
    %v63 = vld [vmem:[%s1 + $0xc] sm:$0xf]
    %v64 = vld [vmem:[%s1 + $0x10] sm:$0xf]
    %v65 = vld [vmem:[%s1 + $0x14] sm:$0xf]
    %v66 = vld [vmem:[%s1 + $0x18] sm:$0xf]
    %v67 = vld [vmem:[%s1 + $0x1c] sm:$0xf]
    %v68 = vld [vmem:[%s1 + $0x20] sm:$0xf]
    %v69 = vld [vmem:[%s1 + $0x24] sm:$0xf]
    %v70 = vld [vmem:[%s1 + $0x28] sm:$0xf]
    %v71 = vld [vmem:[%s1 + $0x2c] sm:$0xf]
    %v72 = vld [vmem:[%s1 + $0x30] sm:$0xf]
    %v73 = vld [vmem:[%s1 + $0x34] sm:$0xf]
    %v74 = vld [vmem:[%s1 + $0x38] sm:$0xf]
    %v75 = vld [vmem:[%s1 + $0x3c] sm:$0xf]
    %v76 = vld [vmem:[%s2] sm:$0xff]
    %v77 = vld [vmem:[%s2 + $0x8] sm:$0xff]
    %v78 = vld [vmem:[%s2 + $0x10] sm:$0xff]
    %v79 = vld [vmem:[%s2 + $0x18] sm:$0xff]
    %v80 = vld [vmem:[%s2 + $0x20] sm:$0xff]
    %v81 = vld [vmem:[%s2 + $0x28] sm:$0xff]
    %v82 = vld [vmem:[%s2 + $0x30] sm:$0xff]
    %v83 = vld [vmem:[%s2 + $0x38] sm:$0xff]
    %v84 = vld [vmem:[%s2 + $0x40] sm:$0xff]
    %v85 = vld [vmem:[%s2 + $0x48] sm:$0xff]
    %v86 = vld [vmem:[%s2 + $0x50] sm:$0xff]
    %v87 = vld [vmem:[%s2 + $0x58] sm:$0xff]
    %v88 = vld [vmem:[%s2 + $0x60] sm:$0xff]
    %v89 = vld [vmem:[%s2 + $0x68] sm:$0xff]
    %v90 = vld [vmem:[%s2 + $0x70] sm:$0xff]
    %v91 = vld [vmem:[%s2 + $0x78] sm:$0xff]
    %93 = vset.pattern.permute.xlu0 0
    %94 = vperm.xlu0 %93, %v76
    %v95 = vpop.permute.xlu0 %94
    %98 = vset.pattern.permute.xlu0 0
    %99 = vperm.xlu0 %98, %v77
    %v100 = vpop.permute.xlu0 %99
    %103 = vset.pattern.permute.xlu0 0
    %104 = vperm.xlu0 %103, %v78
    %v105 = vpop.permute.xlu0 %104
    %108 = vset.pattern.permute.xlu0 0
    %109 = vperm.xlu0 %108, %v79
    %v110 = vpop.permute.xlu0 %109
    %113 = vset.pattern.permute.xlu0 0
    %114 = vperm.xlu0 %113, %v80
    %v115 = vpop.permute.xlu0 %114
    %118 = vset.pattern.permute.xlu0 0
    %119 = vperm.xlu0 %118, %v81
    %v120 = vpop.permute.xlu0 %119
    %123 = vset.pattern.permute.xlu0 0
    %124 = vperm.xlu0 %123, %v82
    %v125 = vpop.permute.xlu0 %124
    %128 = vset.pattern.permute.xlu0 0
    %129 = vperm.xlu0 %128, %v83
    %v130 = vpop.permute.xlu0 %129
    %133 = vset.pattern.permute.xlu0 0
    %134 = vperm.xlu0 %133, %v84
    %v135 = vpop.permute.xlu0 %134
    %138 = vset.pattern.permute.xlu0 0
    %139 = vperm.xlu0 %138, %v85
    %v140 = vpop.permute.xlu0 %139
    %143 = vset.pattern.permute.xlu0 0
    %144 = vperm.xlu0 %143, %v86
    %v145 = vpop.permute.xlu0 %144
    %148 = vset.pattern.permute.xlu0 0
    %149 = vperm.xlu0 %148, %v87
    %v150 = vpop.permute.xlu0 %149
    %153 = vset.pattern.permute.xlu0 0
    %154 = vperm.xlu0 %153, %v88
    %v155 = vpop.permute.xlu0 %154
    %158 = vset.pattern.permute.xlu0 0
    %159 = vperm.xlu0 %158, %v89
    %v160 = vpop.permute.xlu0 %159
    %163 = vset.pattern.permute.xlu0 0
    %164 = vperm.xlu0 %163, %v90
    %v165 = vpop.permute.xlu0 %164
    %168 = vset.pattern.permute.xlu0 0
    %169 = vperm.xlu0 %168, %v91
    %v170 = vpop.permute.xlu0 %169
    %v188 = vunpack.c.l.b16 %v60
    %v189 = vunpack.c.l.b16 %v61
    %v190 = vunpack.c.l.b16 %v62
    %v191 = vunpack.c.l.b16 %v63
    %v192 = vunpack.c.l.b16 %v64
    %v193 = vunpack.c.l.b16 %v65
    %v194 = vunpack.c.l.b16 %v66
    %v195 = vunpack.c.l.b16 %v67
    %v196 = vunpack.c.l.b16 %v68
    %v197 = vunpack.c.l.b16 %v69
    %v198 = vunpack.c.l.b16 %v70
    %v199 = vunpack.c.l.b16 %v71
    %v200 = vunpack.c.l.b16 %v72
    %v201 = vunpack.c.l.b16 %v73
    %v202 = vunpack.c.l.b16 %v74
    %v203 = vunpack.c.l.b16 %v75
    %v204 = vpack.c.b16 %v189, %v188
    %v205 = vpack.c.b16 %v191, %v190
    %v206 = vpack.c.b16 %v193, %v192
    %v207 = vpack.c.b16 %v195, %v194
    %v208 = vpack.c.b16 %v197, %v196
    %v209 = vpack.c.b16 %v199, %v198
    %v210 = vpack.c.b16 %v201, %v200
    %v211 = vpack.c.b16 %v203, %v202
    %vm212 = vcmask 498688
    %v214 = vsel %vm212, %v204, 0
    %v217 = vsel %vm212, %v205, 0
    %v220 = vsel %vm212, %v206, 0
    %v223 = vsel %vm212, %v207, 0
    %v226 = vsel %vm212, %v208, 0
    %v229 = vsel %vm212, %v209, 0
    %v232 = vsel %vm212, %v210, 0
    %v235 = vsel %vm212, %v211, 0
    %v238 = vsel %vm212, %v52, 0
    %v241 = vsel %vm212, %v53, 0
    %v244 = vsel %vm212, %v54, 0
    %v247 = vsel %vm212, %v55, 0
    %v250 = vsel %vm212, %v56, 0
    %v253 = vsel %vm212, %v57, 0
    %v256 = vsel %vm212, %v58, 0
    %v259 = vsel %vm212, %v59, 0
    %261 = vmatprep.subr.bf16.mxu0 0
    %262 = vmatpush1.bf16.xpose.msra.mxu0 %v238
    %263 = vmatprep.subr.bf16.mxu0 0
    %264 = vmatpush1.bf16.xpose.msra.mxu0 %v241
    %265 = vmatprep.subr.bf16.mxu0 0
    %266 = vmatpush1.bf16.xpose.msra.mxu0 %v244
    %267 = vmatprep.subr.bf16.mxu0 0
    %268 = vmatpush1.bf16.xpose.msra.mxu0 %v247
    %269 = vmatprep.subr.bf16.mxu0 0
    %270 = vmatpush1.bf16.xpose.msra.mxu0 %v250
    %271 = vmatprep.subr.bf16.mxu0 0
    %272 = vmatpush1.bf16.xpose.msra.mxu0 %v253
    %273 = vmatprep.subr.bf16.mxu0 0
    %274 = vmatpush1.bf16.xpose.msra.mxu0 %v256
    %275 = vmatprep.subr.bf16.mxu0 0
    %276 = vmatpush1.bf16.xpose.msra.mxu0 %v259
    %277 = vmatprep.subr.bf16.mxu0 0
    %278 = vmatpush1.bf16.xpose.msra.mxu0 0
    %279 = vmatprep.subr.bf16.mxu0 0
    %280 = vmatpush1.bf16.xpose.msra.mxu0 0
    %281 = vmatprep.subr.bf16.mxu0 0
    %282 = vmatpush1.bf16.xpose.msra.mxu0 0
    %283 = vmatprep.subr.bf16.mxu0 0
    %284 = vmatpush1.bf16.xpose.msra.mxu0 0
    %285 = vmatprep.subr.bf16.mxu0 0
    %286 = vmatpush1.bf16.xpose.msra.mxu0 0
    %287 = vmatprep.subr.bf16.mxu0 0
    %288 = vmatpush1.bf16.xpose.msra.mxu0 0
    %289 = vmatprep.subr.bf16.mxu0 0
    %290 = vmatpush1.bf16.xpose.msra.mxu0 0
    %291 = vmatprep.subr.bf16.mxu0 0
    %292 = vmatpush1.bf16.xpose.msra.mxu0 0
    %293 = vmatprep.mubr.bf16.mxu0 0
    %294 = vmatmul.mubr.bf16.gmra.mrb[0].mxu0 %v214
    %v295 = vpop.f32.mrb[0].mxu0
    %v296 = vadd.f32 %v95, %v295
    %v297 = vpop.f32.mrb[0].mxu0
    %v298 = vpop.f32.mrb[0].mxu0
    %v299 = vadd.f32 %v100, %v298
    %v300 = vpop.f32.mrb[0].mxu0
    %301 = vmatprep.mubr.bf16.mxu0 0
    %302 = vmatmul.mubr.bf16.gmra.mrb[0].mxu0 %v217
    %v303 = vpop.f32.mrb[0].mxu0
    %v304 = vadd.f32 %v105, %v303
    %v305 = vpop.f32.mrb[0].mxu0
    %v306 = vpop.f32.mrb[0].mxu0
    %v307 = vadd.f32 %v110, %v306
    %v308 = vpop.f32.mrb[0].mxu0
    %309 = vmatprep.mubr.bf16.mxu0 0
    %310 = vmatmul.mubr.bf16.gmra.mrb[0].mxu0 %v220
    %v311 = vpop.f32.mrb[0].mxu0
    %v312 = vadd.f32 %v115, %v311
    %v313 = vpop.f32.mrb[0].mxu0
    %v314 = vpop.f32.mrb[0].mxu0
    %v315 = vadd.f32 %v120, %v314
    %v316 = vpop.f32.mrb[0].mxu0
    %317 = vmatprep.mubr.bf16.mxu0 0
    %318 = vmatmul.mubr.bf16.gmra.mrb[0].mxu0 %v223
    %v319 = vpop.f32.mrb[0].mxu0
    %v320 = vadd.f32 %v125, %v319
    %v321 = vpop.f32.mrb[0].mxu0
    %v322 = vpop.f32.mrb[0].mxu0
    %v323 = vadd.f32 %v130, %v322
    %v324 = vpop.f32.mrb[0].mxu0
    %325 = vmatprep.mubr.bf16.mxu0 0
    %326 = vmatmul.mubr.bf16.gmra.mrb[0].mxu0 %v226
    %v327 = vpop.f32.mrb[0].mxu0
    %v328 = vadd.f32 %v135, %v327
    %v329 = vpop.f32.mrb[0].mxu0
    %v330 = vpop.f32.mrb[0].mxu0
    %v331 = vadd.f32 %v140, %v330
    %v332 = vpop.f32.mrb[0].mxu0
    %333 = vmatprep.mubr.bf16.mxu0 0
    %334 = vmatmul.mubr.bf16.gmra.mrb[0].mxu0 %v229
    %v335 = vpop.f32.mrb[0].mxu0
    %v336 = vadd.f32 %v145, %v335
    %v337 = vpop.f32.mrb[0].mxu0
    %v338 = vpop.f32.mrb[0].mxu0
    %v339 = vadd.f32 %v150, %v338
    %v340 = vpop.f32.mrb[0].mxu0
    %341 = vmatprep.mubr.bf16.mxu0 0
    %342 = vmatmul.mubr.bf16.gmra.mrb[0].mxu0 %v232
    %v343 = vpop.f32.mrb[0].mxu0
    %v344 = vadd.f32 %v155, %v343
    %v345 = vpop.f32.mrb[0].mxu0
    %v346 = vpop.f32.mrb[0].mxu0
    %v347 = vadd.f32 %v160, %v346
    %v348 = vpop.f32.mrb[0].mxu0
    %349 = vmatprep.mubr.bf16.mxu0 0
    %350 = vmatmul.mubr.bf16.gmra.mrb[0].mxu0 %v235
    %v351 = vpop.f32.mrb[0].mxu0
    %v352 = vadd.f32 %v165, %v351
    %v353 = vpop.f32.mrb[0].mxu0
    %v354 = vpop.f32.mrb[0].mxu0
    %v355 = vadd.f32 %v170, %v354
    %v356 = vpop.f32.mrb[0].mxu0
    %357 = vdwg.mxu0
    %v358 = vmax.f32 %v296, 0.0
    %v359 = vmax.f32 %v299, 0.0
    %v360 = vmax.f32 %v304, 0.0
    %v361 = vmax.f32 %v307, 0.0
    %v362 = vmax.f32 %v312, 0.0
    %v363 = vmax.f32 %v315, 0.0
    %v364 = vmax.f32 %v320, 0.0
    %v365 = vmax.f32 %v323, 0.0
    %v366 = vmax.f32 %v328, 0.0
    %v367 = vmax.f32 %v331, 0.0
    %v368 = vmax.f32 %v336, 0.0
    %v369 = vmax.f32 %v339, 0.0
    %v370 = vmax.f32 %v344, 0.0
    %v371 = vmax.f32 %v347, 0.0
    %v372 = vmax.f32 %v352, 0.0
    %v373 = vmax.f32 %v355, 0.0
    %v374 = vld [vmem:[%s3] sm:$0xf]
    %v375 = vld [vmem:[%s3 + $0x4] sm:$0xf]
    %v376 = vld [vmem:[%s3 + $0x8] sm:$0xf]
    %v377 = vld [vmem:[%s3 + $0xc] sm:$0xf]
    %v378 = vld [vmem:[%s3 + $0x10] sm:$0xf]
    %v379 = vld [vmem:[%s3 + $0x14] sm:$0xf]
    %v380 = vld [vmem:[%s3 + $0x18] sm:$0x1]
    %v381 = vpack.c.bf16 %v359, %v358
    %v382 = vpack.c.bf16 %v361, %v360
    %v383 = vpack.c.bf16 %v363, %v362
    %v384 = vpack.c.bf16 %v365, %v364
    %v385 = vpack.c.bf16 %v367, %v366
    %v386 = vpack.c.bf16 %v369, %v368
    %v387 = vpack.c.bf16 %v371, %v370
    %v388 = vpack.c.bf16 %v373, %v372
    %v389 = vld [vmem:[%s4] sm:$0xff]
    %v390 = vld [vmem:[%s4 + $0x8] sm:$0xff]
    %v391 = vld [vmem:[%s4 + $0x10] sm:$0xff]
    %v392 = vld [vmem:[%s4 + $0x18] sm:$0xff]
    %v393 = vld [vmem:[%s4 + $0x20] sm:$0xff]
    %v394 = vld [vmem:[%s4 + $0x28] sm:$0xff]
    %v395 = vld [vmem:[%s4 + $0x30] sm:$0x3]
    %397 = vset.pattern.permute.xlu0 0
    %398 = vperm.xlu0 %397, %v389
    %v399 = vpop.permute.xlu0 %398
    %402 = vset.pattern.permute.xlu0 0
    %403 = vperm.xlu0 %402, %v390
    %v404 = vpop.permute.xlu0 %403
    %407 = vset.pattern.permute.xlu0 0
    %408 = vperm.xlu0 %407, %v391
    %v409 = vpop.permute.xlu0 %408
    %412 = vset.pattern.permute.xlu0 0
    %413 = vperm.xlu0 %412, %v392
    %v414 = vpop.permute.xlu0 %413
    %417 = vset.pattern.permute.xlu0 0
    %418 = vperm.xlu0 %417, %v393
    %v419 = vpop.permute.xlu0 %418
    %422 = vset.pattern.permute.xlu0 0
    %423 = vperm.xlu0 %422, %v394
    %v424 = vpop.permute.xlu0 %423
    %427 = vset.pattern.permute.xlu0 0
    %428 = vperm.xlu0 %427, %v395
    %v429 = vpop.permute.xlu0 %428
    %v438 = vunpack.c.l.b16 %v374
    %v439 = vunpack.c.l.b16 %v375
    %v440 = vunpack.c.l.b16 %v376
    %v441 = vunpack.c.l.b16 %v377
    %v442 = vunpack.c.l.b16 %v378
    %v443 = vunpack.c.l.b16 %v379
    %v444 = vunpack.c.l.b16 %v380
    %v445 = vpack.c.b16 %v439, %v438
    %v446 = vpack.c.b16 %v441, %v440
    %v447 = vpack.c.b16 %v443, %v442
    %v448 = vpack.c.b16 %v444, %v444
    %453 = vmatprep.subr.bf16.mxu0 0
    %454 = vmatpush1.bf16.msra.mxu0 %v381
    %455 = vmatprep.subr.bf16.mxu0 0
    %456 = vmatpush1.bf16.msra.mxu0 %v382
    %457 = vmatprep.subr.bf16.mxu0 0
    %458 = vmatpush1.bf16.msra.mxu0 %v383
    %459 = vmatprep.subr.bf16.mxu0 0
    %460 = vmatpush1.bf16.msra.mxu0 %v384
    %461 = vmatprep.subr.bf16.mxu0 0
    %462 = vmatpush1.bf16.msra.mxu0 %v385
    %463 = vmatprep.subr.bf16.mxu0 0
    %464 = vmatpush1.bf16.msra.mxu0 %v386
    %465 = vmatprep.subr.bf16.mxu0 0
    %466 = vmatpush1.bf16.msra.mxu0 %v387
    %467 = vmatprep.subr.bf16.mxu0 0
    %468 = vmatpush1.bf16.msra.mxu0 %v388
    %469 = vmatprep.subr.bf16.mxu0 0
    %470 = vmatpush1.bf16.msra.mxu0 0
    %471 = vmatprep.subr.bf16.mxu0 0
    %472 = vmatpush1.bf16.msra.mxu0 0
    %473 = vmatprep.subr.bf16.mxu0 0
    %474 = vmatpush1.bf16.msra.mxu0 0
    %475 = vmatprep.subr.bf16.mxu0 0
    %476 = vmatpush1.bf16.msra.mxu0 0
    %477 = vmatprep.subr.bf16.mxu0 0
    %478 = vmatpush1.bf16.msra.mxu0 0
    %479 = vmatprep.subr.bf16.mxu0 0
    %480 = vmatpush1.bf16.msra.mxu0 0
    %481 = vmatprep.subr.bf16.mxu0 0
    %482 = vmatpush1.bf16.msra.mxu0 0
    %483 = vmatprep.subr.bf16.mxu0 0
    %484 = vmatpush1.bf16.msra.mxu0 0
    %485 = vmatprep.mubr.bf16.mxu0 0
    %486 = vmatmul.mubr.bf16.gmra.mrb[0].mxu0 %v445
    %v487 = vpop.f32.mrb[0].mxu0
    %v488 = vadd.f32 %v399, %v487
    %v489 = vpop.f32.mrb[0].mxu0
    %v490 = vpop.f32.mrb[0].mxu0
    %v491 = vadd.f32 %v404, %v490
    %v492 = vpop.f32.mrb[0].mxu0
    %493 = vmatprep.mubr.bf16.mxu0 0
    %494 = vmatmul.mubr.bf16.gmra.mrb[0].mxu0 %v446
    %v495 = vpop.f32.mrb[0].mxu0
    %v496 = vadd.f32 %v409, %v495
    %v497 = vpop.f32.mrb[0].mxu0
    %v498 = vpop.f32.mrb[0].mxu0
    %v499 = vadd.f32 %v414, %v498
    %v500 = vpop.f32.mrb[0].mxu0
    %501 = vmatprep.mubr.bf16.mxu0 0
    %502 = vmatmul.mubr.bf16.gmra.mrb[0].mxu0 %v447
    %v503 = vpop.f32.mrb[0].mxu0
    %v504 = vadd.f32 %v419, %v503
    %v505 = vpop.f32.mrb[0].mxu0
    %v506 = vpop.f32.mrb[0].mxu0
    %v507 = vadd.f32 %v424, %v506
    %v508 = vpop.f32.mrb[0].mxu0
    %509 = vmatprep.mubr.bf16.mxu0 0
    %510 = vmatmul.mubr.bf16.gmra.mrb[0].mxu0 %v448
    %v511 = vpop.f32.mrb[0].mxu0
    %v512 = vadd.f32 %v429, %v511
    %v513 = vpop.f32.mrb[0].mxu0
    %v514 = vpop.f32.mrb[0].mxu0
    %v515 = vpop.f32.mrb[0].mxu0
    %516 = vdwg.mxu0
    %v517 = vmax.f32 %v488, 0.0
    %v518 = vmax.f32 %v491, 0.0
    %v519 = vmax.f32 %v496, 0.0
    %v520 = vmax.f32 %v499, 0.0
    %v521 = vmax.f32 %v504, 0.0
    %v522 = vmax.f32 %v507, 0.0
    %v523 = vmax.f32 %v512, 0.0
    %v524 = vld [vmem:[%s5] sm:$0xf]
    %v525 = vld [vmem:[%s5 + $0x4] sm:$0xf]
    %v526 = vld [vmem:[%s5 + $0x8] sm:$0xf]
    %v527 = vpack.c.bf16 %v518, %v517
    %v528 = vpack.c.bf16 %v520, %v519
    %v529 = vpack.c.bf16 %v522, %v521
    %v530 = vpack.c.bf16 %v523, %v523
    %v531 = vld [vmem:[%s6] sm:$0xff]
    %v532 = vld [vmem:[%s6 + $0x8] sm:$0xff]
    %v533 = vld [vmem:[%s6 + $0x10] sm:$0xff]
    %535 = vset.pattern.permute.xlu0 0
    %536 = vperm.xlu0 %535, %v531
    %v537 = vpop.permute.xlu0 %536
    %540 = vset.pattern.permute.xlu0 0
    %541 = vperm.xlu0 %540, %v532
    %v542 = vpop.permute.xlu0 %541
    %545 = vset.pattern.permute.xlu0 0
    %546 = vperm.xlu0 %545, %v533
    %v547 = vpop.permute.xlu0 %546
    %v552 = vunpack.c.l.b16 %v524
    %v553 = vunpack.c.l.b16 %v525
    %v554 = vunpack.c.l.b16 %v526
    %v555 = vpack.c.b16 %v553, %v552
    %v556 = vpack.c.b16 %v554, %v554
    %vm557 = vcmask 408576
    %v559 = vsel %vm557, %v555, 0
    %v562 = vsel %vm557, %v556, 0
    %vm564 = vcmask 1040384
    %v566 = vsel %vm564, %v530, 0
    %568 = vmatprep.subr.bf16.mxu0 0
    %569 = vmatpush1.bf16.msra.mxu0 %v527
    %570 = vmatprep.subr.bf16.mxu0 0
    %571 = vmatpush1.bf16.msra.mxu0 %v528
    %572 = vmatprep.subr.bf16.mxu0 0
    %573 = vmatpush1.bf16.msra.mxu0 %v529
    %574 = vmatprep.subr.bf16.mxu0 0
    %575 = vmatpush1.bf16.msra.mxu0 %v566
    %576 = vmatprep.subr.bf16.mxu0 0
    %577 = vmatpush1.bf16.msra.mxu0 0
    %578 = vmatprep.subr.bf16.mxu0 0
    %579 = vmatpush1.bf16.msra.mxu0 0
    %580 = vmatprep.subr.bf16.mxu0 0
    %581 = vmatpush1.bf16.msra.mxu0 0
    %582 = vmatprep.subr.bf16.mxu0 0
    %583 = vmatpush1.bf16.msra.mxu0 0
    %584 = vmatprep.subr.bf16.mxu0 0
    %585 = vmatpush1.bf16.msra.mxu0 0
    %586 = vmatprep.subr.bf16.mxu0 0
    %587 = vmatpush1.bf16.msra.mxu0 0
    %588 = vmatprep.subr.bf16.mxu0 0
    %589 = vmatpush1.bf16.msra.mxu0 0
    %590 = vmatprep.subr.bf16.mxu0 0
    %591 = vmatpush1.bf16.msra.mxu0 0
    %592 = vmatprep.subr.bf16.mxu0 0
    %593 = vmatpush1.bf16.msra.mxu0 0
    %594 = vmatprep.subr.bf16.mxu0 0
    %595 = vmatpush1.bf16.msra.mxu0 0
    %596 = vmatprep.subr.bf16.mxu0 0
    %597 = vmatpush1.bf16.msra.mxu0 0
    %598 = vmatprep.subr.bf16.mxu0 0
    %599 = vmatpush1.bf16.msra.mxu0 0
    %600 = vmatprep.mubr.bf16.mxu0 0
    %601 = vmatmul.mubr.bf16.gmra.mrb[0].mxu0 %v559
    %v602 = vpop.f32.mrb[0].mxu0
    %v603 = vadd.f32 %v537, %v602
    %v604 = vpop.f32.mrb[0].mxu0
    %v605 = vpop.f32.mrb[0].mxu0
    %v606 = vadd.f32 %v542, %v605
    %v607 = vpop.f32.mrb[0].mxu0
    %608 = vmatprep.mubr.bf16.mxu0 0
    %609 = vmatmul.mubr.bf16.gmra.mrb[0].mxu0 %v562
    %v610 = vpop.f32.mrb[0].mxu0
    %v611 = vadd.f32 %v547, %v610
    %v612 = vpop.f32.mrb[0].mxu0
    %v613 = vpop.f32.mrb[0].mxu0
    %v614 = vpop.f32.mrb[0].mxu0
    %615 = vdwg.mxu0
    %v616 = vmax.f32 %v603, 0.0
    %v617 = vmax.f32 %v606, 0.0
    %v618 = vmax.f32 %v611, 0.0
    %v619 = vld [vmem:[%s7] sm:$0x1]
    %v620 = vpack.c.bf16 %v617, %v616
    %v621 = vpack.c.bf16 %v618, %v618
    %v622 = vld [vmem:[#allocation2] sm:$0x1]
    %624 = vset.pattern.permute.xlu0 0
    %625 = vperm.xlu0 %624, %v622
    %v626 = vpop.permute.xlu0 %625
    %v628 = vlaneseq
    %v629 = vshrl.u32 %v628, 7
    %v630 = vsub.s32 0, %v629
    %v631 = vrot.slane %v626, %v630
    %vm632 = vcmask 195584
    %v634 = vsel %vm632, %v619, 0
    %vm636 = vcmask 1043456
    %v638 = vsel %vm636, %v621, 0
    %640 = vmatprep.subr.bf16.mxu0 0
    %641 = vmatpush1.bf16.msra.mxu0 %v620
    %642 = vmatprep.subr.bf16.mxu0 0
    %643 = vmatpush1.bf16.msra.mxu0 %v638
    %644 = vmatprep.subr.bf16.mxu0 0
    %645 = vmatpush1.bf16.msra.mxu0 0
    %646 = vmatprep.subr.bf16.mxu0 0
    %647 = vmatpush1.bf16.msra.mxu0 0
    %648 = vmatprep.subr.bf16.mxu0 0
    %649 = vmatpush1.bf16.msra.mxu0 0
    %650 = vmatprep.subr.bf16.mxu0 0
    %651 = vmatpush1.bf16.msra.mxu0 0
    %652 = vmatprep.subr.bf16.mxu0 0
    %653 = vmatpush1.bf16.msra.mxu0 0
    %654 = vmatprep.subr.bf16.mxu0 0
    %655 = vmatpush1.bf16.msra.mxu0 0
    %656 = vmatprep.subr.bf16.mxu0 0
    %657 = vmatpush1.bf16.msra.mxu0 0
    %658 = vmatprep.subr.bf16.mxu0 0
    %659 = vmatpush1.bf16.msra.mxu0 0
    %660 = vmatprep.subr.bf16.mxu0 0
    %661 = vmatpush1.bf16.msra.mxu0 0
    %662 = vmatprep.subr.bf16.mxu0 0
    %663 = vmatpush1.bf16.msra.mxu0 0
    %664 = vmatprep.subr.bf16.mxu0 0
    %665 = vmatpush1.bf16.msra.mxu0 0
    %666 = vmatprep.subr.bf16.mxu0 0
    %667 = vmatpush1.bf16.msra.mxu0 0
    %668 = vmatprep.subr.bf16.mxu0 0
    %669 = vmatpush1.bf16.msra.mxu0 0
    %670 = vmatprep.subr.bf16.mxu0 0
    %671 = vmatpush1.bf16.msra.mxu0 0
    %672 = vmatprep.mubr.bf16.mxu0 0
    %673 = vmatmul.mubr.bf16.gmra.mrb[0].mxu0 %v634
    %v674 = vpop.f32.mrb[0].mxu0
    %v675 = vadd.f32 %v631, %v674
    %v676 = vpop.f32.mrb[0].mxu0
    %v677 = vpop.f32.mrb[0].mxu0
    %v678 = vpop.f32.mrb[0].mxu0
    %679 = vdwg.mxu0
    %v680 = vxor.u32 %v675, 2147483648
    %v681 = vmul.f32 %v680, 1.442695
    %v682 = vpow.pop %v681
    %v683 = vadd.f32 %v682, 1.0
    %v684 = vrcp.pop %v683
    %v685 = vmul.f32 1.0, %v684
    %686 = vst [vmem:[#allocation3] sm:$0x1] %v685
    // Predicated region
    $region38: #{mlp_forward.1} parent=1 // pred_check
      _
    $region39: #{mlp_forward.1} parent=1 // pred_check_branch
      %688 = sbr.rel (0) target = $region41
    $region40: #{mlp_forward.1} parent=1 // pred_region
      %s690 = ssub.s32 16, 16
      %691 = vsyncadd [#allocation4], %s690
      %s693 = sshll.u32 [#allocation3], 4
      %s694 = int_to_ptr.vmem [resolvable:$true] %s693
      %696 = dma.vmem_to_hbm [thread:$0]  %s694, 16, %s9, [#allocation4]
    $region41: #{mlp_forward.1} parent=1 // pred_fallthru
      _
    // Predicated region
    $region42: #{mlp_forward.1} parent=1 // pred_check
      _
    $region43: #{mlp_forward.1} parent=1 // pred_check_branch
      %698 = sbr.rel (0) target = $region45
    $region44: #{mlp_forward.1} parent=1 // pred_region
      %699 = dma.done [#allocation4], 16
    $region45: #{mlp_forward.1} parent=1 // pred_fallthru
      _
    %700 = vsyncpa [#allocation4], 1

</llo_original>
